<compile_context>
chip_gen: v7x
topology: tpu7x:2x2x1
jax: 0.10.0
libtpu: 0.0.40
codegen_flags: <defaults>
</compile_context>

<pallas_src>
import functools

import jax
import jax.numpy as jnp
from jax.experimental import pallas as pl
from jax.experimental.pallas import tpu as pltpu

VPAD = 128    # vocab padded to the 128-lane vreg width (token ids must lie in [0, VPAD))
HPAD = 128    # hidden (100) padded to 128
CPAD = 128    # num_classes padded to 128 lanes for the second MXU matmul
COUT = 8      # num_classes padded to 8 for the HBM output (compact writeback)
STRIP = 32    # rows per counts strip: 4-vreg accumulator, never spills


def _round_up(x, m):
    return ((x + m - 1) // m) * m


def cbow_kernel(tok_ref, w_eff_ref, b1_ref, w2_ref, b2_ref, out_ref, counts_ref,
                *, inv_batch):
    TB, S = tok_ref.shape
    n_strips = TB // STRIP

    # Single-vreg iota constant (1, 128); the compare broadcasts it against each strip.
    iota_v = jax.lax.broadcasted_iota(jnp.int32, (1, VPAD), 1)

    # Strip-mined bag-of-words counts:
    #   counts[b, v] = #{ s : tok[b, s] == v } * (1/B)
    # Per strip the accumulator is 4 vregs and lives entirely in registers; each strip is
    # written exactly once to the VMEM scratch (one store per 4 vregs instead of S of them).
    @pl.loop(0, n_strips)
    def _(st):
        row0 = pl.multiple_of(st * STRIP, STRIP)
        tok = tok_ref[pl.ds(row0, STRIP), :]                       # (STRIP, S) int32
        counts = jnp.zeros((STRIP, VPAD), jnp.float32)
        for s in range(S):                                         # unrolled, stays in vregs
            counts = counts + (tok[:, s:s + 1] == iota_v).astype(jnp.float32)
        # Fold the 1/B mean scale (static, true batch size) in here — linear, so it commutes
        # with the matmul and keeps W_eff batch-independent (hoistable param prep).
        counts_ref[pl.ds(row0, STRIP), :] = counts * inv_batch

    # lin1 (embedding lookup + seq-pool pre-folded into w_eff) + ReLU: one MXU matmul.
    h = jnp.dot(counts_ref[...], w_eff_ref[...],
                preferred_element_type=jnp.float32) + b1_ref[...]
    h = jnp.maximum(h, 0.0)

    # TODO(synk): dropout is identity in eval mode; training-mode dropout would need
    # pltpu.prng_seed / pltpu.prng_random_bits in-kernel.

    # fc: 128-lane padded matmul, but only the first COUT(=8) lanes are written to HBM
    # (16x less output DMA than a 128-wide writeback; real classes are the first C columns).
    logits = jnp.dot(h, w2_ref[...], preferred_element_type=jnp.float32) + b2_ref[...]
    out_ref[...] = logits[:, :COUT].astype(out_ref.dtype)


def prepare_cbow_params(embed_table, w1, b1, w2, b2):
    """One-time parameter prep: fold embed@W1 and zero-pad everything to lane widths.

    Hoisted out of the forward path so the HIGHEST-precision (V,D)@(D,H) matmul and the
    pad-scatters are not re-run on every call.
    """
    V, D = embed_table.shape
    H = w1.shape[1]
    C = w2.shape[1]
    assert V <= VPAD, "vocab must fit the 128-lane counts build"
    assert H <= HPAD and C <= COUT

    highest = jax.lax.Precision.HIGHEST
    w_eff = jnp.dot(embed_table, w1, precision=highest)                     # (V, H)
    w_eff_p = jnp.zeros((VPAD, HPAD), jnp.float32).at[:V, :H].set(w_eff)
    b1_p = jnp.zeros((1, HPAD), jnp.float32).at[0, :H].set(b1)
    w2_p = jnp.zeros((HPAD, CPAD), jnp.float32).at[:H, :C].set(w2)
    b2_p = jnp.zeros((1, CPAD), jnp.float32).at[0, :C].set(b2)
    return {"w_eff": w_eff_p, "b1": b1_p, "w2": w2_p, "b2": b2_p, "num_classes": C}


def cbow_mean_forward(token_ids, params):
    """token_ids: [B, S] int32. params: output of prepare_cbow_params.

    Returns logits [B, num_classes] float32.
    """
    B, S = token_ids.shape
    C = params["num_classes"]

    # Batch tiling: for B <= 1024 aim for exactly 2 tiles (so v7x's 2 TCs both get work
    # and mid-size batches don't pad grossly); for large B use 512-row tiles to amortize
    # the ~0.35 us per-grid-step overhead. TB is always a multiple of STRIP (and of 8).
    if B > 1024:
        TB = 512
    else:
        TB = max(STRIP, _round_up(-(-B // 2), STRIP))
    B_pad = _round_up(B, TB)
    tok_p = jnp.zeros((B_pad, S), jnp.int32).at[:B, :].set(token_ids.astype(jnp.int32))

    kernel = functools.partial(cbow_kernel, inv_batch=1.0 / B)   # true batch size (quirk)

    out = pl.pallas_call(
        kernel,
        out_shape=jax.ShapeDtypeStruct((B_pad, COUT), jnp.float32),
        grid_spec=pltpu.PrefetchScalarGridSpec(
            num_scalar_prefetch=0,
            grid=(B_pad // TB,),
            in_specs=[
                pl.BlockSpec((TB, S), lambda i: (i, 0)),          # token ids (tiled over B)
                pl.BlockSpec((VPAD, HPAD), lambda i: (0, 0)),     # folded embed@W1 (padded)
                pl.BlockSpec((1, HPAD), lambda i: (0, 0)),        # b1 (padded)
                pl.BlockSpec((HPAD, CPAD), lambda i: (0, 0)),     # W2 (padded)
                pl.BlockSpec((1, CPAD), lambda i: (0, 0)),        # b2 (padded)
            ],
            out_specs=pl.BlockSpec((TB, COUT), lambda i: (i, 0)),  # compact 8-lane output
            scratch_shapes=[pltpu.VMEM((TB, VPAD), jnp.float32)],  # counts scratch
        ),
        compiler_params=pltpu.CompilerParams(
            dimension_semantics=("parallel",),          # shards batch tiles across TCs on v7x
            vmem_limit_bytes=32 * 1024 * 1024,          # tiny footprint; safe on v7x's 64 MiB
        ),
    )(tok_p, params["w_eff"], params["b1"], params["w2"], params["b2"])

    return out[:B, :C]


def reference_forward(token_ids, embed_table, w1, b1, w2, b2):
    highest = jax.lax.Precision.HIGHEST
    emb = jnp.take(embed_table, token_ids, axis=0)                 # (B, S, D)
    pooled = jnp.sum(emb, axis=1) / token_ids.shape[0]             # PyTorch quirk: / batch size
    h = jnp.maximum(jnp.dot(pooled, w1, precision=highest) + b1, 0.0)
    return jnp.dot(h, w2, precision=highest) + b2


if __name__ == "__main__":
    # Module hyperparameters (small, consistent with the forward).
    num_classes = 4
    vocab_size = 50
    embedding_dim = 32
    hidden = 100          # fixed by nn.Linear(embedding_dim, 100)
    B, S = 8, 8

    key = jax.random.PRNGKey(0)
    k_emb, k_w1, k_b1, k_w2, k_b2, k_x = jax.random.split(key, 6)

    embed_table = jax.random.normal(k_emb, (vocab_size, embedding_dim), jnp.float32) * 0.1
    w1 = jax.random.normal(k_w1, (embedding_dim, hidden), jnp.float32) * 0.1
    b1 = jax.random.normal(k_b1, (hidden,), jnp.float32) * 0.1
    w2 = jax.random.normal(k_w2, (hidden, num_classes), jnp.float32) * 0.1
    b2 = jax.random.normal(k_b2, (num_classes,), jnp.float32) * 0.1

    # One-time parameter prep (fold + pad), hoisted out of the per-call forward path.
    params = prepare_cbow_params(embed_table, w1, b1, w2, b2)

    token_ids = jax.random.randint(k_x, (B, S), 0, vocab_size, jnp.int32)
    out = jax.block_until_ready(cbow_mean_forward(token_ids, params))
    ref = reference_forward(token_ids, embed_table, w1, b1, w2, b2)
    assert out.shape == (B, num_classes)
    # Tolerance accommodates MXU matmul-pass precision differences between the refactored
    # (counts-matmul + pre-folded W_eff) path and the gather-based reference.
    assert jnp.allclose(out, ref, atol=5e-3, rtol=5e-3), "mismatch vs reference (small batch)"

    # Larger batch: exercises the 2-tile grid (TB=160, grid=(2,)) and the padding/slice path.
    B2, S2 = 300, 16
    tok2 = jax.random.randint(jax.random.PRNGKey(1), (B2, S2), 0, vocab_size, jnp.int32)
    out2 = jax.block_until_ready(cbow_mean_forward(tok2, params))
    ref2 = reference_forward(tok2, embed_table, w1, b1, w2, b2)
    assert out2.shape == (B2, num_classes)
    assert jnp.allclose(out2, ref2, atol=5e-3, rtol=5e-3), "mismatch vs reference (tiled batch)"

    print("KERNEL_OK")
</pallas_src>

<mosaic_0001>
module attributes {stable_mosaic.version = 11 : i64} {
  func.func @cbow_kernel(%arg0: i32, %arg1: memref<32x8xi32, #tpu.memory_space<vmem>>, %arg2: memref<128x128xf32, #tpu.memory_space<vmem>>, %arg3: memref<1x128xf32, #tpu.memory_space<vmem>>, %arg4: memref<128x128xf32, #tpu.memory_space<vmem>>, %arg5: memref<1x128xf32, #tpu.memory_space<vmem>>, %arg6: memref<32x8xf32, #tpu.memory_space<vmem>>, %arg7: memref<32x128xf32, #tpu.memory_space<vmem>>) attributes {dimension_semantics = [#tpu.dimension_semantics<parallel>], iteration_bounds = array<i64: 1>, scalar_prefetch = 0 : i64, scratch_operands = 1 : i64, tpu.core_type = #tpu.core_type<tc>, window_params = [{transform_indices = @transform_0, window_bounds = array<i64: 32, 8>}, {pipeline_mode = #tpu.pipeline_mode<synchronous>, transform_indices = @transform_1, window_bounds = array<i64: 128, 128>}, {pipeline_mode = #tpu.pipeline_mode<synchronous>, transform_indices = @transform_2, window_bounds = array<i64: 1, 128>}, {pipeline_mode = #tpu.pipeline_mode<synchronous>, transform_indices = @transform_3, window_bounds = array<i64: 128, 128>}, {pipeline_mode = #tpu.pipeline_mode<synchronous>, transform_indices = @transform_4, window_bounds = array<i64: 1, 128>}, {transform_indices = @transform_5, window_bounds = array<i64: 32, 8>}]} {
    %0 = tpu.iota {dimensions = array<i32: 1>} : vector<1x128xi32>
    %c0_i32 = arith.constant 0 : i32
    %c1_i32 = arith.constant 1 : i32
    %1 = arith.muli %c0_i32, %c1_i32 : i32
    %c0_i32_0 = arith.constant 0 : i32
    %2 = arith.addi %c0_i32_0, %1 : i32
    %c32_i32 = arith.constant 32 : i32
    %3 = arith.muli %2, %c32_i32 : i32
    %4 = tpu.assume_multiple %3, 32 : i32
    %5 = arith.index_cast %4 : i32 to index
    %c0 = arith.constant 0 : index
    %6 = vector.load %arg1[%5, %c0] : memref<32x8xi32, #tpu.memory_space<vmem>>, vector<32x8xi32>
    %cst = arith.constant 0.000000e+00 : f32
    %7 = vector.broadcast %cst : f32 to vector<32x128xf32>
    %8 = vector.extract_strided_slice %6 {offsets = [0, 0], sizes = [32, 1], strides = [1, 1]} : vector<32x8xi32> to vector<32x1xi32>
    %9 = vector.broadcast %8 : vector<32x1xi32> to vector<32x128xi32>
    %10 = vector.broadcast %0 : vector<1x128xi32> to vector<32x128xi32>
    %11 = arith.cmpi eq, %9, %10 : vector<32x128xi32>
    %12 = arith.extui %11 : vector<32x128xi1> to vector<32x128xi32>
    %13 = arith.sitofp %12 : vector<32x128xi32> to vector<32x128xf32>
    %14 = arith.addf %7, %13 : vector<32x128xf32>
    %15 = vector.extract_strided_slice %6 {offsets = [0, 1], sizes = [32, 1], strides = [1, 1]} : vector<32x8xi32> to vector<32x1xi32>
    %16 = vector.broadcast %15 : vector<32x1xi32> to vector<32x128xi32>
    %17 = vector.broadcast %0 : vector<1x128xi32> to vector<32x128xi32>
    %18 = arith.cmpi eq, %16, %17 : vector<32x128xi32>
    %19 = arith.extui %18 : vector<32x128xi1> to vector<32x128xi32>
    %20 = arith.sitofp %19 : vector<32x128xi32> to vector<32x128xf32>
    %21 = arith.addf %14, %20 : vector<32x128xf32>
    %22 = vector.extract_strided_slice %6 {offsets = [0, 2], sizes = [32, 1], strides = [1, 1]} : vector<32x8xi32> to vector<32x1xi32>
    %23 = vector.broadcast %22 : vector<32x1xi32> to vector<32x128xi32>
    %24 = vector.broadcast %0 : vector<1x128xi32> to vector<32x128xi32>
    %25 = arith.cmpi eq, %23, %24 : vector<32x128xi32>
    %26 = arith.extui %25 : vector<32x128xi1> to vector<32x128xi32>
    %27 = arith.sitofp %26 : vector<32x128xi32> to vector<32x128xf32>
    %28 = arith.addf %21, %27 : vector<32x128xf32>
    %29 = vector.extract_strided_slice %6 {offsets = [0, 3], sizes = [32, 1], strides = [1, 1]} : vector<32x8xi32> to vector<32x1xi32>
    %30 = vector.broadcast %29 : vector<32x1xi32> to vector<32x128xi32>
    %31 = vector.broadcast %0 : vector<1x128xi32> to vector<32x128xi32>
    %32 = arith.cmpi eq, %30, %31 : vector<32x128xi32>
    %33 = arith.extui %32 : vector<32x128xi1> to vector<32x128xi32>
    %34 = arith.sitofp %33 : vector<32x128xi32> to vector<32x128xf32>
    %35 = arith.addf %28, %34 : vector<32x128xf32>
    %36 = vector.extract_strided_slice %6 {offsets = [0, 4], sizes = [32, 1], strides = [1, 1]} : vector<32x8xi32> to vector<32x1xi32>
    %37 = vector.broadcast %36 : vector<32x1xi32> to vector<32x128xi32>
    %38 = vector.broadcast %0 : vector<1x128xi32> to vector<32x128xi32>
    %39 = arith.cmpi eq, %37, %38 : vector<32x128xi32>
    %40 = arith.extui %39 : vector<32x128xi1> to vector<32x128xi32>
    %41 = arith.sitofp %40 : vector<32x128xi32> to vector<32x128xf32>
    %42 = arith.addf %35, %41 : vector<32x128xf32>
    %43 = vector.extract_strided_slice %6 {offsets = [0, 5], sizes = [32, 1], strides = [1, 1]} : vector<32x8xi32> to vector<32x1xi32>
    %44 = vector.broadcast %43 : vector<32x1xi32> to vector<32x128xi32>
    %45 = vector.broadcast %0 : vector<1x128xi32> to vector<32x128xi32>
    %46 = arith.cmpi eq, %44, %45 : vector<32x128xi32>
    %47 = arith.extui %46 : vector<32x128xi1> to vector<32x128xi32>
    %48 = arith.sitofp %47 : vector<32x128xi32> to vector<32x128xf32>
    %49 = arith.addf %42, %48 : vector<32x128xf32>
    %50 = vector.extract_strided_slice %6 {offsets = [0, 6], sizes = [32, 1], strides = [1, 1]} : vector<32x8xi32> to vector<32x1xi32>
    %51 = vector.broadcast %50 : vector<32x1xi32> to vector<32x128xi32>
    %52 = vector.broadcast %0 : vector<1x128xi32> to vector<32x128xi32>
    %53 = arith.cmpi eq, %51, %52 : vector<32x128xi32>
    %54 = arith.extui %53 : vector<32x128xi1> to vector<32x128xi32>
    %55 = arith.sitofp %54 : vector<32x128xi32> to vector<32x128xf32>
    %56 = arith.addf %49, %55 : vector<32x128xf32>
    %57 = vector.extract_strided_slice %6 {offsets = [0, 7], sizes = [32, 1], strides = [1, 1]} : vector<32x8xi32> to vector<32x1xi32>
    %58 = vector.broadcast %57 : vector<32x1xi32> to vector<32x128xi32>
    %59 = vector.broadcast %0 : vector<1x128xi32> to vector<32x128xi32>
    %60 = arith.cmpi eq, %58, %59 : vector<32x128xi32>
    %61 = arith.extui %60 : vector<32x128xi1> to vector<32x128xi32>
    %62 = arith.sitofp %61 : vector<32x128xi32> to vector<32x128xf32>
    %63 = arith.addf %56, %62 : vector<32x128xf32>
    %cst_1 = arith.constant 1.250000e-01 : f32
    %64 = vector.broadcast %cst_1 : f32 to vector<32x128xf32>
    %65 = arith.mulf %63, %64 : vector<32x128xf32>
    %66 = arith.index_cast %4 : i32 to index
    %c0_2 = arith.constant 0 : index
    %67 = vector.load %arg7[%66, %c0_2] : memref<32x128xf32, #tpu.memory_space<vmem>>, vector<32x128xf32>
    tpu.vector_store %arg7[%66, %c0_2], %65 {strides = array<i32>} : memref<32x128xf32, #tpu.memory_space<vmem>>, vector<32x128xf32>,
    %c1_i32_3 = arith.constant 1 : i32
    %c0_4 = arith.constant 0 : index
    %c0_5 = arith.constant 0 : index
    %68 = vector.load %arg7[%c0_4, %c0_5] : memref<32x128xf32, #tpu.memory_space<vmem>>, vector<32x128xf32>
    %c0_6 = arith.constant 0 : index
    %c0_7 = arith.constant 0 : index
    %69 = vector.load %arg2[%c0_6, %c0_7] : memref<128x128xf32, #tpu.memory_space<vmem>>, vector<128x128xf32>
    %cst_8 = arith.constant dense<0.000000e+00> : vector<32x128xf32>
    %70 = tpu.matmul %68, %69, %cst_8 {dimension_numbers = #tpu.dot_dimension_numbers<[1], [0], [0], [1], [0, 0, 1, 1], [], []>} : vector<32x128xf32>, vector<128x128xf32>, vector<32x128xf32> -> vector<32x128xf32>
    %c0_9 = arith.constant 0 : index
    %c0_10 = arith.constant 0 : index
    %71 = vector.load %arg3[%c0_9, %c0_10] : memref<1x128xf32, #tpu.memory_space<vmem>>, vector<1x128xf32>
    %72 = vector.broadcast %71 : vector<1x128xf32> to vector<32x128xf32>
    %73 = arith.addf %70, %72 : vector<32x128xf32>
    %cst_11 = arith.constant 0.000000e+00 : f32
    %74 = vector.broadcast %cst_11 : f32 to vector<32x128xf32>
    %75 = arith.maximumf %73, %74 : vector<32x128xf32>
    %c0_12 = arith.constant 0 : index
    %c0_13 = arith.constant 0 : index
    %76 = vector.load %arg4[%c0_12, %c0_13] : memref<128x128xf32, #tpu.memory_space<vmem>>, vector<128x128xf32>
    %cst_14 = arith.constant dense<0.000000e+00> : vector<32x128xf32>
    %77 = tpu.matmul %75, %76, %cst_14 {dimension_numbers = #tpu.dot_dimension_numbers<[1], [0], [0], [1], [0, 0, 1, 1], [], []>} : vector<32x128xf32>, vector<128x128xf32>, vector<32x128xf32> -> vector<32x128xf32>
    %c0_15 = arith.constant 0 : index
    %c0_16 = arith.constant 0 : index
    %78 = vector.load %arg5[%c0_15, %c0_16] : memref<1x128xf32, #tpu.memory_space<vmem>>, vector<1x128xf32>
    %79 = vector.broadcast %78 : vector<1x128xf32> to vector<32x128xf32>
    %80 = arith.addf %77, %79 : vector<32x128xf32>
    %81 = vector.extract_strided_slice %80 {offsets = [0, 0], sizes = [32, 8], strides = [1, 1]} : vector<32x128xf32> to vector<32x8xf32>
    %c0_17 = arith.constant 0 : index
    %c0_18 = arith.constant 0 : index
    %82 = vector.load %arg6[%c0_17, %c0_18] : memref<32x8xf32, #tpu.memory_space<vmem>>, vector<32x8xf32>
    tpu.vector_store %arg6[%c0_17, %c0_18], %81 {strides = array<i32>} : memref<32x8xf32, #tpu.memory_space<vmem>>, vector<32x8xf32>,
    return
  }
  func.func @transform_0(%arg0: i32) -> (i32, i32) {
    %c0_i32 = arith.constant 0 : i32
    %c0_i32_0 = arith.constant 0 : i32
    return %arg0, %c0_i32 : i32, i32
  }
  func.func @transform_1(%arg0: i32) -> (i32, i32) {
    %c0_i32 = arith.constant 0 : i32
    %c0_i32_0 = arith.constant 0 : i32
    %c0_i32_1 = arith.constant 0 : i32
    return %c0_i32, %c0_i32_0 : i32, i32
  }
  func.func @transform_2(%arg0: i32) -> (i32, i32) {
    %c0_i32 = arith.constant 0 : i32
    %c0_i32_0 = arith.constant 0 : i32
    %c0_i32_1 = arith.constant 0 : i32
    return %c0_i32, %c0_i32_0 : i32, i32
  }
  func.func @transform_3(%arg0: i32) -> (i32, i32) {
    %c0_i32 = arith.constant 0 : i32
    %c0_i32_0 = arith.constant 0 : i32
    %c0_i32_1 = arith.constant 0 : i32
    return %c0_i32, %c0_i32_0 : i32, i32
  }
  func.func @transform_4(%arg0: i32) -> (i32, i32) {
    %c0_i32 = arith.constant 0 : i32
    %c0_i32_0 = arith.constant 0 : i32
    %c0_i32_1 = arith.constant 0 : i32
    return %c0_i32, %c0_i32_0 : i32, i32
  }
  func.func @transform_5(%arg0: i32) -> (i32, i32) {
    %c0_i32 = arith.constant 0 : i32
    %c0_i32_0 = arith.constant 0 : i32
    return %arg0, %c0_i32 : i32, i32
  }
}

</mosaic_0001>

<llo_original>
// kernel: tpu_custom_call.1
$region0: #{tpu_custom_call.1}
  #allocation0 [shape = 'u32[]', space=smem, size = 0x4, offset = 0x4, fixed_abs, tag = 'smem constant byte address 0x4 - core index']
  #allocation1 [shape = 'u32[144,128]{1,0:T(1,128)}', space=vmem, size = 0x12000, scoped, tag = 'internal scratch']
  #allocation2 [shape = 'f32[32,128]{1,0:T(8,128)}', space=vmem, size = 0x4000, scoped, tag = 'scratch operand']
  %s0 = inlined_call_operand.vmem [shape: s32[32,8], index: 0, kind: input, shape index: {}]
  %s1 = inlined_call_operand.hbm [shape: f32[128,128], index: 1, kind: input, shape index: {}]
  %s2 = inlined_call_operand.vmem [shape: f32[1,128], index: 2, kind: input, shape index: {}]
  %s3 = inlined_call_operand.hbm [shape: f32[128,128], index: 3, kind: input, shape index: {}]
  %s4 = inlined_call_operand.vmem [shape: f32[1,128], index: 4, kind: input, shape index: {}]
  %s5 = inlined_call_operand.vmem [shape: f32[32,8], index: 5, kind: output, shape index: {}]
  %s6 = sld [smem:[#allocation0]]
  $region38: #{tpu_custom_call.1} parent=0
    _
  %s8 = ssub.s32 1, %s6
  %s9 = scalar_select 0, %s8, %s6
  $region1: #{tpu_custom_call.1} parent=0
    #allocation3 [shape = 'u8[65536]{0}', space=vmem, size = 0x10000, scoped, tag = 'input window, operand 1, single buffered']
    #allocation4 [shape = 's32[1]{0}', space=sflag, size = 0x4, scoped, tag = 'scoped memory for tpu_custom_call.1']
    #allocation5 [shape = 'u8[65536]{0}', space=vmem, size = 0x10000, scoped, tag = 'input window, operand 3, single buffered']
    #allocation6 [shape = 's32[1]{0}', space=sflag, size = 0x4, scoped, tag = 'scoped memory for tpu_custom_call.1']
    %10 = vsyncpa [#allocation4], 0
    %11 = vsyncpa [#allocation6], 0
    // Predicated region
    $region2: #{tpu_custom_call.1} parent=1 // pred_check
      _
    $region3: #{tpu_custom_call.1} parent=1 // pred_check_branch
      %13 = sbr.rel (0) target = $region5
    $region4: #{tpu_custom_call.1} parent=1 // pred_region
      _
    $region5: #{tpu_custom_call.1} parent=1 // pred_fallthru
      _
    // Predicated region
    $region6: #{tpu_custom_call.1} parent=1 // pred_check
      _
    $region7: #{tpu_custom_call.1} parent=1 // pred_check_branch
      %15 = sbr.rel (0) target = $region9
    $region8: #{tpu_custom_call.1} parent=1 // pred_region
      %s17 = ssub.s32 2048, 2048
      %18 = vsyncadd [#allocation4], %s17
      %s19 = sshll.u32 [#allocation3], 4
      %s20 = int_to_ptr.vmem [resolvable:$true] %s19
      %25 = dma.hbm_to_vmem [thread:$0]  %s1, 2048, %s20, [#allocation4], 128, 128, 8
    $region9: #{tpu_custom_call.1} parent=1 // pred_fallthru
      _
    // Predicated region
    $region10: #{tpu_custom_call.1} parent=1 // pred_check
      _
    $region11: #{tpu_custom_call.1} parent=1 // pred_check_branch
      %27 = sbr.rel (0) target = $region13
    $region12: #{tpu_custom_call.1} parent=1 // pred_region
      _
    $region13: #{tpu_custom_call.1} parent=1 // pred_fallthru
      _
    // Predicated region
    $region14: #{tpu_custom_call.1} parent=1 // pred_check
      _
    $region15: #{tpu_custom_call.1} parent=1 // pred_check_branch
      %29 = sbr.rel (0) target = $region17
    $region16: #{tpu_custom_call.1} parent=1 // pred_region
      %s31 = ssub.s32 2048, 2048
      %32 = vsyncadd [#allocation6], %s31
      %s33 = sshll.u32 [#allocation5], 4
      %s34 = int_to_ptr.vmem [resolvable:$true] %s33
      %39 = dma.hbm_to_vmem [thread:$0]  %s3, 2048, %s34, [#allocation6], 128, 128, 8
    $region17: #{tpu_custom_call.1} parent=1 // pred_fallthru
      _
    // Predicated region
    $region18: #{tpu_custom_call.1} parent=1 // pred_check
      _
    $region19: #{tpu_custom_call.1} parent=1 // pred_check_branch
      %41 = sbr.rel (0) target = $region21
    $region20: #{tpu_custom_call.1} parent=1 // pred_region
      _
    $region21: #{tpu_custom_call.1} parent=1 // pred_fallthru
      _
    // Predicated region
    $region22: #{tpu_custom_call.1} parent=1 // pred_check
      _
    $region23: #{tpu_custom_call.1} parent=1 // pred_check_branch
      %43 = sbr.rel (0) target = $region25
    $region24: #{tpu_custom_call.1} parent=1 // pred_region
      %44 = dma.done [#allocation4], 2048
    $region25: #{tpu_custom_call.1} parent=1 // pred_fallthru
      _
    // Predicated region
    $region26: #{tpu_custom_call.1} parent=1 // pred_check
      _
    $region27: #{tpu_custom_call.1} parent=1 // pred_check_branch
      %46 = sbr.rel (0) target = $region29
    $region28: #{tpu_custom_call.1} parent=1 // pred_region
      %47 = dma.done [#allocation6], 2048
    $region29: #{tpu_custom_call.1} parent=1 // pred_fallthru
      _
    %v48 = vlaneseq
    %v49 = vand.u32 %v48, 127
    %v50 = vld [vmem:[%s0] sm:$0xff]
    %v51 = vld [vmem:[%s0 + $0x8] sm:$0xff]
    %v52 = vld [vmem:[%s0 + $0x10] sm:$0xff]
    %v53 = vld [vmem:[%s0 + $0x18] sm:$0xff]
    %54 = vset.pattern.permute.xlu0 0
    %55 = vperm.xlu0 %54, %v50
    %v56 = vpop.permute.xlu0 %55
    %57 = vset.pattern.permute.xlu0 0
    %58 = vperm.xlu0 %57, %v51
    %v59 = vpop.permute.xlu0 %58
    %60 = vset.pattern.permute.xlu0 0
    %61 = vperm.xlu0 %60, %v52
    %v62 = vpop.permute.xlu0 %61
    %63 = vset.pattern.permute.xlu0 0
    %64 = vperm.xlu0 %63, %v53
    %v65 = vpop.permute.xlu0 %64
    %vm66 = vcmp.eq.s32.totalorder %v56, %v49
    %vm67 = vcmp.eq.s32.totalorder %v59, %v49
    %vm68 = vcmp.eq.s32.totalorder %v62, %v49
    %vm69 = vcmp.eq.s32.totalorder %v65, %v49
    %v70 = vsel %vm66, 1, 0
    %v71 = vsel %vm67, 1, 0
    %v72 = vsel %vm68, 1, 0
    %v73 = vsel %vm69, 1, 0
    %v74 = vcvt.s32.f32 %v70
    %v75 = vcvt.s32.f32 %v71
    %v76 = vcvt.s32.f32 %v72
    %v77 = vcvt.s32.f32 %v73
    %v78 = vadd.f32 %v74, 0.0
    %v79 = vadd.f32 %v75, 0.0
    %v80 = vadd.f32 %v76, 0.0
    %v81 = vadd.f32 %v77, 0.0
    %82 = vset.pattern.permute.xlu0 1
    %83 = vperm.xlu0 %82, %v50
    %v84 = vpop.permute.xlu0 %83
    %85 = vset.pattern.permute.xlu0 1
    %86 = vperm.xlu0 %85, %v51
    %v87 = vpop.permute.xlu0 %86
    %88 = vset.pattern.permute.xlu0 1
    %89 = vperm.xlu0 %88, %v52
    %v90 = vpop.permute.xlu0 %89
    %91 = vset.pattern.permute.xlu0 1
    %92 = vperm.xlu0 %91, %v53
    %v93 = vpop.permute.xlu0 %92
    %vm94 = vcmp.eq.s32.totalorder %v84, %v49
    %vm95 = vcmp.eq.s32.totalorder %v87, %v49
    %vm96 = vcmp.eq.s32.totalorder %v90, %v49
    %vm97 = vcmp.eq.s32.totalorder %v93, %v49
    %v98 = vsel %vm94, 1, 0
    %v99 = vsel %vm95, 1, 0
    %v100 = vsel %vm96, 1, 0
    %v101 = vsel %vm97, 1, 0
    %v102 = vcvt.s32.f32 %v98
    %v103 = vcvt.s32.f32 %v99
    %v104 = vcvt.s32.f32 %v100
    %v105 = vcvt.s32.f32 %v101
    %v106 = vadd.f32 %v78, %v102
    %v107 = vadd.f32 %v79, %v103
    %v108 = vadd.f32 %v80, %v104
    %v109 = vadd.f32 %v81, %v105
    %110 = vset.pattern.permute.xlu0 2
    %111 = vperm.xlu0 %110, %v50
    %v112 = vpop.permute.xlu0 %111
    %113 = vset.pattern.permute.xlu0 2
    %114 = vperm.xlu0 %113, %v51
    %v115 = vpop.permute.xlu0 %114
    %116 = vset.pattern.permute.xlu0 2
    %117 = vperm.xlu0 %116, %v52
    %v118 = vpop.permute.xlu0 %117
    %119 = vset.pattern.permute.xlu0 2
    %120 = vperm.xlu0 %119, %v53
    %v121 = vpop.permute.xlu0 %120
    %vm122 = vcmp.eq.s32.totalorder %v112, %v49
    %vm123 = vcmp.eq.s32.totalorder %v115, %v49
    %vm124 = vcmp.eq.s32.totalorder %v118, %v49
    %vm125 = vcmp.eq.s32.totalorder %v121, %v49
    %v126 = vsel %vm122, 1, 0
    %v127 = vsel %vm123, 1, 0
    %v128 = vsel %vm124, 1, 0
    %v129 = vsel %vm125, 1, 0
    %v130 = vcvt.s32.f32 %v126
    %v131 = vcvt.s32.f32 %v127
    %v132 = vcvt.s32.f32 %v128
    %v133 = vcvt.s32.f32 %v129
    %v134 = vadd.f32 %v106, %v130
    %v135 = vadd.f32 %v107, %v131
    %v136 = vadd.f32 %v108, %v132
    %v137 = vadd.f32 %v109, %v133
    %138 = vset.pattern.permute.xlu0 3
    %139 = vperm.xlu0 %138, %v50
    %v140 = vpop.permute.xlu0 %139
    %141 = vset.pattern.permute.xlu0 3
    %142 = vperm.xlu0 %141, %v51
    %v143 = vpop.permute.xlu0 %142
    %144 = vset.pattern.permute.xlu0 3
    %145 = vperm.xlu0 %144, %v52
    %v146 = vpop.permute.xlu0 %145
    %147 = vset.pattern.permute.xlu0 3
    %148 = vperm.xlu0 %147, %v53
    %v149 = vpop.permute.xlu0 %148
    %vm150 = vcmp.eq.s32.totalorder %v140, %v49
    %vm151 = vcmp.eq.s32.totalorder %v143, %v49
    %vm152 = vcmp.eq.s32.totalorder %v146, %v49
    %vm153 = vcmp.eq.s32.totalorder %v149, %v49
    %v154 = vsel %vm150, 1, 0
    %v155 = vsel %vm151, 1, 0
    %v156 = vsel %vm152, 1, 0
    %v157 = vsel %vm153, 1, 0
    %v158 = vcvt.s32.f32 %v154
    %v159 = vcvt.s32.f32 %v155
    %v160 = vcvt.s32.f32 %v156
    %v161 = vcvt.s32.f32 %v157
    %v162 = vadd.f32 %v134, %v158
    %v163 = vadd.f32 %v135, %v159
    %v164 = vadd.f32 %v136, %v160
    %v165 = vadd.f32 %v137, %v161
    %166 = vset.pattern.permute.xlu0 4
    %167 = vperm.xlu0 %166, %v50
    %v168 = vpop.permute.xlu0 %167
    %169 = vset.pattern.permute.xlu0 4
    %170 = vperm.xlu0 %169, %v51
    %v171 = vpop.permute.xlu0 %170
    %172 = vset.pattern.permute.xlu0 4
    %173 = vperm.xlu0 %172, %v52
    %v174 = vpop.permute.xlu0 %173
    %175 = vset.pattern.permute.xlu0 4
    %176 = vperm.xlu0 %175, %v53
    %v177 = vpop.permute.xlu0 %176
    %vm178 = vcmp.eq.s32.totalorder %v168, %v49
    %vm179 = vcmp.eq.s32.totalorder %v171, %v49
    %vm180 = vcmp.eq.s32.totalorder %v174, %v49
    %vm181 = vcmp.eq.s32.totalorder %v177, %v49
    %v182 = vsel %vm178, 1, 0
    %v183 = vsel %vm179, 1, 0
    %v184 = vsel %vm180, 1, 0
    %v185 = vsel %vm181, 1, 0
    %v186 = vcvt.s32.f32 %v182
    %v187 = vcvt.s32.f32 %v183
    %v188 = vcvt.s32.f32 %v184
    %v189 = vcvt.s32.f32 %v185
    %v190 = vadd.f32 %v162, %v186
    %v191 = vadd.f32 %v163, %v187
    %v192 = vadd.f32 %v164, %v188
    %v193 = vadd.f32 %v165, %v189
    %194 = vset.pattern.permute.xlu0 5
    %195 = vperm.xlu0 %194, %v50
    %v196 = vpop.permute.xlu0 %195
    %197 = vset.pattern.permute.xlu0 5
    %198 = vperm.xlu0 %197, %v51
    %v199 = vpop.permute.xlu0 %198
    %200 = vset.pattern.permute.xlu0 5
    %201 = vperm.xlu0 %200, %v52
    %v202 = vpop.permute.xlu0 %201
    %203 = vset.pattern.permute.xlu0 5
    %204 = vperm.xlu0 %203, %v53
    %v205 = vpop.permute.xlu0 %204
    %vm206 = vcmp.eq.s32.totalorder %v196, %v49
    %vm207 = vcmp.eq.s32.totalorder %v199, %v49
    %vm208 = vcmp.eq.s32.totalorder %v202, %v49
    %vm209 = vcmp.eq.s32.totalorder %v205, %v49
    %v210 = vsel %vm206, 1, 0
    %v211 = vsel %vm207, 1, 0
    %v212 = vsel %vm208, 1, 0
    %v213 = vsel %vm209, 1, 0
    %v214 = vcvt.s32.f32 %v210
    %v215 = vcvt.s32.f32 %v211
    %v216 = vcvt.s32.f32 %v212
    %v217 = vcvt.s32.f32 %v213
    %v218 = vadd.f32 %v190, %v214
    %v219 = vadd.f32 %v191, %v215
    %v220 = vadd.f32 %v192, %v216
    %v221 = vadd.f32 %v193, %v217
    %222 = vset.pattern.permute.xlu0 6
    %223 = vperm.xlu0 %222, %v50
    %v224 = vpop.permute.xlu0 %223
    %225 = vset.pattern.permute.xlu0 6
    %226 = vperm.xlu0 %225, %v51
    %v227 = vpop.permute.xlu0 %226
    %228 = vset.pattern.permute.xlu0 6
    %229 = vperm.xlu0 %228, %v52
    %v230 = vpop.permute.xlu0 %229
    %231 = vset.pattern.permute.xlu0 6
    %232 = vperm.xlu0 %231, %v53
    %v233 = vpop.permute.xlu0 %232
    %vm234 = vcmp.eq.s32.totalorder %v224, %v49
    %vm235 = vcmp.eq.s32.totalorder %v227, %v49
    %vm236 = vcmp.eq.s32.totalorder %v230, %v49
    %vm237 = vcmp.eq.s32.totalorder %v233, %v49
    %v238 = vsel %vm234, 1, 0
    %v239 = vsel %vm235, 1, 0
    %v240 = vsel %vm236, 1, 0
    %v241 = vsel %vm237, 1, 0
    %v242 = vcvt.s32.f32 %v238
    %v243 = vcvt.s32.f32 %v239
    %v244 = vcvt.s32.f32 %v240
    %v245 = vcvt.s32.f32 %v241
    %v246 = vadd.f32 %v218, %v242
    %v247 = vadd.f32 %v219, %v243
    %v248 = vadd.f32 %v220, %v244
    %v249 = vadd.f32 %v221, %v245
    %250 = vset.pattern.permute.xlu0 7
    %251 = vperm.xlu0 %250, %v50
    %v252 = vpop.permute.xlu0 %251
    %253 = vset.pattern.permute.xlu0 7
    %254 = vperm.xlu0 %253, %v51
    %v255 = vpop.permute.xlu0 %254
    %256 = vset.pattern.permute.xlu0 7
    %257 = vperm.xlu0 %256, %v52
    %v258 = vpop.permute.xlu0 %257
    %259 = vset.pattern.permute.xlu0 7
    %260 = vperm.xlu0 %259, %v53
    %v261 = vpop.permute.xlu0 %260
    %vm262 = vcmp.eq.s32.totalorder %v252, %v49
    %vm263 = vcmp.eq.s32.totalorder %v255, %v49
    %vm264 = vcmp.eq.s32.totalorder %v258, %v49
    %vm265 = vcmp.eq.s32.totalorder %v261, %v49
    %v266 = vsel %vm262, 1, 0
    %v267 = vsel %vm263, 1, 0
    %v268 = vsel %vm264, 1, 0
    %v269 = vsel %vm265, 1, 0
    %v270 = vcvt.s32.f32 %v266
    %v271 = vcvt.s32.f32 %v267
    %v272 = vcvt.s32.f32 %v268
    %v273 = vcvt.s32.f32 %v269
    %v274 = vadd.f32 %v246, %v270
    %v275 = vadd.f32 %v247, %v271
    %v276 = vadd.f32 %v248, %v272
    %v277 = vadd.f32 %v249, %v273
    %v278 = vmul.f32 %v274, 0.125
    %v279 = vmul.f32 %v275, 0.125
    %v280 = vmul.f32 %v276, 0.125
    %v281 = vmul.f32 %v277, 0.125
    %282 = vst [vmem:[#allocation2] sm:$0xff] %v278
    %283 = vst [vmem:[#allocation2 + $0x8] sm:$0xff] %v279
    %284 = vst [vmem:[#allocation2 + $0x10] sm:$0xff] %v280
    %285 = vst [vmem:[#allocation2 + $0x18] sm:$0xff] %v281
    %v286 = vld [vmem:[#allocation2] sm:$0xff]
    %v287 = vld [vmem:[#allocation2 + $0x8] sm:$0xff]
    %v288 = vld [vmem:[#allocation2 + $0x10] sm:$0xff]
    %v289 = vld [vmem:[#allocation2 + $0x18] sm:$0xff]
    %v290 = vld [vmem:[#allocation3] sm:$0xff]
    %v291 = vld [vmem:[#allocation3 + $0x8] sm:$0xff]
    %v292 = vld [vmem:[#allocation3 + $0x10] sm:$0xff]
    %v293 = vld [vmem:[#allocation3 + $0x18] sm:$0xff]
    %v294 = vld [vmem:[#allocation3 + $0x20] sm:$0xff]
    %v295 = vld [vmem:[#allocation3 + $0x28] sm:$0xff]
    %v296 = vld [vmem:[#allocation3 + $0x30] sm:$0xff]
    %v297 = vld [vmem:[#allocation3 + $0x38] sm:$0xff]
    %v298 = vld [vmem:[#allocation3 + $0x40] sm:$0xff]
    %v299 = vld [vmem:[#allocation3 + $0x48] sm:$0xff]
    %v300 = vld [vmem:[#allocation3 + $0x50] sm:$0xff]
    %v301 = vld [vmem:[#allocation3 + $0x58] sm:$0xff]
    %v302 = vld [vmem:[#allocation3 + $0x60] sm:$0xff]
    %v303 = vld [vmem:[#allocation3 + $0x68] sm:$0xff]
    %v304 = vld [vmem:[#allocation3 + $0x70] sm:$0xff]
    %v305 = vld [vmem:[#allocation3 + $0x78] sm:$0xff]
    %v306 = vld [vmem:[%s2] sm:$0x1]
    %v308 = vlaneseq
    %v309 = vshrl.u32 %v308, 7
    %v310 = vsub.s32 0, %v309
    %v311 = vrot.slane %v306, %v310
    %313 = vmatprep.subr.mxu0 0.0
    %314 = vmatpush1.msra.mxu0 %v290
    %315 = vmatprep.subr.mxu0 0.0
    %316 = vmatpush1.msra.mxu0 %v291
    %317 = vmatprep.subr.mxu0 0.0
    %318 = vmatpush1.msra.mxu0 %v292
    %319 = vmatprep.subr.mxu0 0.0
    %320 = vmatpush1.msra.mxu0 %v293
    %321 = vmatprep.subr.mxu0 0.0
    %322 = vmatpush1.msra.mxu0 %v294
    %323 = vmatprep.subr.mxu0 0.0
    %324 = vmatpush1.msra.mxu0 %v295
    %325 = vmatprep.subr.mxu0 0.0
    %326 = vmatpush1.msra.mxu0 %v296
    %327 = vmatprep.subr.mxu0 0.0
    %328 = vmatpush1.msra.mxu0 %v297
    %329 = vmatprep.subr.mxu0 0.0
    %330 = vmatpush1.msra.mxu0 %v298
    %331 = vmatprep.subr.mxu0 0.0
    %332 = vmatpush1.msra.mxu0 %v299
    %333 = vmatprep.subr.mxu0 0.0
    %334 = vmatpush1.msra.mxu0 %v300
    %335 = vmatprep.subr.mxu0 0.0
    %336 = vmatpush1.msra.mxu0 %v301
    %337 = vmatprep.subr.mxu0 0.0
    %338 = vmatpush1.msra.mxu0 %v302
    %339 = vmatprep.subr.mxu0 0.0
    %340 = vmatpush1.msra.mxu0 %v303
    %341 = vmatprep.subr.mxu0 0.0
    %342 = vmatpush1.msra.mxu0 %v304
    %343 = vmatprep.subr.mxu0 0.0
    %344 = vmatpush1.msra.mxu0 %v305
    %345 = vmatprep.subr.mxu0 0.0
    %346 = vmatpush1.msra.mxu0 0.0
    %347 = vmatprep.subr.mxu0 0.0
    %348 = vmatpush1.msra.mxu0 0.0
    %349 = vmatprep.subr.mxu0 0.0
    %350 = vmatpush1.msra.mxu0 0.0
    %351 = vmatprep.subr.mxu0 0.0
    %352 = vmatpush1.msra.mxu0 0.0
    %353 = vmatprep.subr.mxu0 0.0
    %354 = vmatpush1.msra.mxu0 0.0
    %355 = vmatprep.subr.mxu0 0.0
    %356 = vmatpush1.msra.mxu0 0.0
    %357 = vmatprep.subr.mxu0 0.0
    %358 = vmatpush1.msra.mxu0 0.0
    %359 = vmatprep.subr.mxu0 0.0
    %360 = vmatpush1.msra.mxu0 0.0
    %361 = vmatprep.subr.mxu0 0.0
    %362 = vmatpush1.msra.mxu0 0.0
    %363 = vmatprep.subr.mxu0 0.0
    %364 = vmatpush1.msra.mxu0 0.0
    %365 = vmatprep.subr.mxu0 0.0
    %366 = vmatpush1.msra.mxu0 0.0
    %367 = vmatprep.subr.mxu0 0.0
    %368 = vmatpush1.msra.mxu0 0.0
    %369 = vmatprep.subr.mxu0 0.0
    %370 = vmatpush1.msra.mxu0 0.0
    %371 = vmatprep.subr.mxu0 0.0
    %372 = vmatpush1.msra.mxu0 0.0
    %373 = vmatprep.subr.mxu0 0.0
    %374 = vmatpush1.msra.mxu0 0.0
    %375 = vmatprep.subr.mxu0 0.0
    %376 = vmatpush1.msra.mxu0 0.0
    %377 = vmatprep.mubr.f32.mxu0 0.0
    %378 = vmatmul.mubr.f32.gmra.mrb[0].mxu0 %v286
    %v379 = vpop.f32.mrb[0].mxu0
    %v380 = vadd.f32 %v311, %v379
    %v381 = vpop.f32.mrb[0].mxu0
    %382 = vmatprep.mubr.f32.mxu0 0.0
    %383 = vmatmul.mubr.f32.gmra.mrb[0].mxu0 %v287
    %v384 = vpop.f32.mrb[0].mxu0
    %v385 = vadd.f32 %v311, %v384
    %v386 = vpop.f32.mrb[0].mxu0
    %387 = vmatprep.mubr.f32.mxu0 0.0
    %388 = vmatmul.mubr.f32.gmra.mrb[0].mxu0 %v288
    %v389 = vpop.f32.mrb[0].mxu0
    %v390 = vadd.f32 %v311, %v389
    %v391 = vpop.f32.mrb[0].mxu0
    %392 = vmatprep.mubr.f32.mxu0 0.0
    %393 = vmatmul.mubr.f32.gmra.mrb[0].mxu0 %v289
    %v394 = vpop.f32.mrb[0].mxu0
    %v395 = vadd.f32 %v311, %v394
    %v396 = vpop.f32.mrb[0].mxu0
    %397 = vdwg.mxu0
    %v398 = vmax.f32 %v380, 0.0
    %v399 = vmax.f32 %v385, 0.0
    %v400 = vmax.f32 %v390, 0.0
    %v401 = vmax.f32 %v395, 0.0
    %v402 = vld [vmem:[#allocation5] sm:$0xff]
    %v403 = vld [vmem:[#allocation5 + $0x8] sm:$0xff]
    %v404 = vld [vmem:[#allocation5 + $0x10] sm:$0xff]
    %v405 = vld [vmem:[#allocation5 + $0x18] sm:$0xff]
    %v406 = vld [vmem:[#allocation5 + $0x20] sm:$0xff]
    %v407 = vld [vmem:[#allocation5 + $0x28] sm:$0xff]
    %v408 = vld [vmem:[#allocation5 + $0x30] sm:$0xff]
    %v409 = vld [vmem:[#allocation5 + $0x38] sm:$0xff]
    %v410 = vld [vmem:[#allocation5 + $0x40] sm:$0xff]
    %v411 = vld [vmem:[#allocation5 + $0x48] sm:$0xff]
    %v412 = vld [vmem:[#allocation5 + $0x50] sm:$0xff]
    %v413 = vld [vmem:[#allocation5 + $0x58] sm:$0xff]
    %v414 = vld [vmem:[#allocation5 + $0x60] sm:$0xff]
    %v415 = vld [vmem:[#allocation5 + $0x68] sm:$0xff]
    %v416 = vld [vmem:[#allocation5 + $0x70] sm:$0xff]
    %v417 = vld [vmem:[#allocation5 + $0x78] sm:$0xff]
    %v418 = vld [vmem:[%s4] sm:$0x1]
    %v420 = vlaneseq
    %v421 = vshrl.u32 %v420, 7
    %v422 = vsub.s32 0, %v421
    %v423 = vrot.slane %v418, %v422
    %425 = vmatprep.subr.mxu0 0.0
    %426 = vmatpush1.msra.mxu0 %v402
    %427 = vmatprep.subr.mxu0 0.0
    %428 = vmatpush1.msra.mxu0 %v403
    %429 = vmatprep.subr.mxu0 0.0
    %430 = vmatpush1.msra.mxu0 %v404
    %431 = vmatprep.subr.mxu0 0.0
    %432 = vmatpush1.msra.mxu0 %v405
    %433 = vmatprep.subr.mxu0 0.0
    %434 = vmatpush1.msra.mxu0 %v406
    %435 = vmatprep.subr.mxu0 0.0
    %436 = vmatpush1.msra.mxu0 %v407
    %437 = vmatprep.subr.mxu0 0.0
    %438 = vmatpush1.msra.mxu0 %v408
    %439 = vmatprep.subr.mxu0 0.0
    %440 = vmatpush1.msra.mxu0 %v409
    %441 = vmatprep.subr.mxu0 0.0
    %442 = vmatpush1.msra.mxu0 %v410
    %443 = vmatprep.subr.mxu0 0.0
    %444 = vmatpush1.msra.mxu0 %v411
    %445 = vmatprep.subr.mxu0 0.0
    %446 = vmatpush1.msra.mxu0 %v412
    %447 = vmatprep.subr.mxu0 0.0
    %448 = vmatpush1.msra.mxu0 %v413
    %449 = vmatprep.subr.mxu0 0.0
    %450 = vmatpush1.msra.mxu0 %v414
    %451 = vmatprep.subr.mxu0 0.0
    %452 = vmatpush1.msra.mxu0 %v415
    %453 = vmatprep.subr.mxu0 0.0
    %454 = vmatpush1.msra.mxu0 %v416
    %455 = vmatprep.subr.mxu0 0.0
    %456 = vmatpush1.msra.mxu0 %v417
    %457 = vmatprep.subr.mxu0 0.0
    %458 = vmatpush1.msra.mxu0 0.0
    %459 = vmatprep.subr.mxu0 0.0
    %460 = vmatpush1.msra.mxu0 0.0
    %461 = vmatprep.subr.mxu0 0.0
    %462 = vmatpush1.msra.mxu0 0.0
    %463 = vmatprep.subr.mxu0 0.0
    %464 = vmatpush1.msra.mxu0 0.0
    %465 = vmatprep.subr.mxu0 0.0
    %466 = vmatpush1.msra.mxu0 0.0
    %467 = vmatprep.subr.mxu0 0.0
    %468 = vmatpush1.msra.mxu0 0.0
    %469 = vmatprep.subr.mxu0 0.0
    %470 = vmatpush1.msra.mxu0 0.0
    %471 = vmatprep.subr.mxu0 0.0
    %472 = vmatpush1.msra.mxu0 0.0
    %473 = vmatprep.subr.mxu0 0.0
    %474 = vmatpush1.msra.mxu0 0.0
    %475 = vmatprep.subr.mxu0 0.0
    %476 = vmatpush1.msra.mxu0 0.0
    %477 = vmatprep.subr.mxu0 0.0
    %478 = vmatpush1.msra.mxu0 0.0
    %479 = vmatprep.subr.mxu0 0.0
    %480 = vmatpush1.msra.mxu0 0.0
    %481 = vmatprep.subr.mxu0 0.0
    %482 = vmatpush1.msra.mxu0 0.0
    %483 = vmatprep.subr.mxu0 0.0
    %484 = vmatpush1.msra.mxu0 0.0
    %485 = vmatprep.subr.mxu0 0.0
    %486 = vmatpush1.msra.mxu0 0.0
    %487 = vmatprep.subr.mxu0 0.0
    %488 = vmatpush1.msra.mxu0 0.0
    %489 = vmatprep.mubr.f32.mxu0 0.0
    %490 = vmatmul.mubr.f32.gmra.mrb[0].mxu0 %v398
    %v491 = vpop.f32.mrb[0].mxu0
    %v492 = vadd.f32 %v423, %v491
    %v493 = vpop.f32.mrb[0].mxu0
    %494 = vmatprep.mubr.f32.mxu0 0.0
    %495 = vmatmul.mubr.f32.gmra.mrb[0].mxu0 %v399
    %v496 = vpop.f32.mrb[0].mxu0
    %v497 = vadd.f32 %v423, %v496
    %v498 = vpop.f32.mrb[0].mxu0
    %499 = vmatprep.mubr.f32.mxu0 0.0
    %500 = vmatmul.mubr.f32.gmra.mrb[0].mxu0 %v400
    %v501 = vpop.f32.mrb[0].mxu0
    %v502 = vadd.f32 %v423, %v501
    %v503 = vpop.f32.mrb[0].mxu0
    %504 = vmatprep.mubr.f32.mxu0 0.0
    %505 = vmatmul.mubr.f32.gmra.mrb[0].mxu0 %v401
    %v506 = vpop.f32.mrb[0].mxu0
    %v507 = vadd.f32 %v423, %v506
    %v508 = vpop.f32.mrb[0].mxu0
    %509 = vdwg.mxu0
    %vm510 = vcmask 64512
    %511 = vst.msk [vmem:[%s5] sm:$0xff] %vm510, %v492
    %512 = vst.msk [vmem:[%s5 + $0x8] sm:$0xff] %vm510, %v497
    %513 = vst.msk [vmem:[%s5 + $0x10] sm:$0xff] %vm510, %v502
    %514 = vst.msk [vmem:[%s5 + $0x18] sm:$0xff] %vm510, %v507
    // Predicated region
    $region30: #{tpu_custom_call.1} parent=1 // pred_check
      _
    $region31: #{tpu_custom_call.1} parent=1 // pred_check_branch
      %516 = sbr.rel (0) target = $region33
    $region32: #{tpu_custom_call.1} parent=1 // pred_region
      _
    $region33: #{tpu_custom_call.1} parent=1 // pred_fallthru
      _
    // Predicated region
    $region34: #{tpu_custom_call.1} parent=1 // pred_check
      _
    $region35: #{tpu_custom_call.1} parent=1 // pred_check_branch
      %518 = sbr.rel (0) target = $region37
    $region36: #{tpu_custom_call.1} parent=1 // pred_region
      _
    $region37: #{tpu_custom_call.1} parent=1 // pred_fallthru
      _
    %519 = vsyncpa [#allocation4], 1
    %520 = vsyncpa [#allocation6], 1

</llo_original>
